<compile_context>
chip_gen: v7x
topology: tpu7x:2x2x1
jax: 0.10.0
libtpu: 0.0.40
codegen_flags: <defaults>
</compile_context>

<pallas_src>
import jax
import jax.numpy as jnp
from jax.experimental import pallas as pl
from jax.experimental.pallas import tpu as pltpu


_LANE_CHOICES = (1024, 512, 256, 128)      # lane widths, all multiples of 128
_TARGET_BLOCK_BYTES = 8 * 1024 * 1024      # in + out bytes moved per grid step
_VMEM_LIMIT_BYTES = 40 * 1024 * 1024       # >= 2x double-buffered working set
_DEFAULT_MIN_PALLAS_ELEMS = 64 * 1024      # below this, plain JAX wins (launch
                                           # overhead + lost fusion)


def _sigmoid_density_kernel(alpha_ref, sdf_ref, out_ref):
    # alpha_ref: SMEM (1,) f32 holding alpha = 1 / beta_eff (precomputed).
    alpha = alpha_ref[0]
    x = sdf_ref[...].astype(jnp.float32)
    out_ref[...] = (alpha * jax.nn.sigmoid(-x * alpha)).astype(out_ref.dtype)


def _round_down(x, m):
    return (x // m) * m


def _round_up(x, m):
    return ((x + m - 1) // m) * m


def sigmoid_density(sdf, beta_param, beta_min_param, beta=None, *,
                    min_pallas_elems=_DEFAULT_MIN_PALLAS_ELEMS):
    """Pallas implementation of SigmoidDensity.forward.

    sdf:              jnp array of any shape (the 'bs...' tensor).
    beta_param:       learnable beta parameter, shape (1,).
    beta_min_param:   beta_min parameter, shape (1,).
    beta:             optional explicit beta. A scalar uses the Pallas path; a
                      per-element / broadcastable beta tensor is handled by the
                      plain-JAX path (still exact).
    min_pallas_elems: element-count threshold below which plain JAX is used.
    """
    # ---- resolve beta / alpha ------------------------------------------------
    if beta is not None:
        beta_arr = jnp.asarray(beta)
        if beta_arr.size != 1:
            # Per-element / broadcast explicit beta: the SMEM-scalar kernel does
            # not apply; compute exactly in plain JAX (HBM-roofline elementwise).
            alpha_full = 1.0 / beta_arr
            return alpha_full * jax.nn.sigmoid(-sdf * alpha_full)
        beta_eff = beta_arr.astype(jnp.float32).reshape(1)
    else:
        beta_eff = (jnp.abs(beta_param) + beta_min_param).astype(jnp.float32).reshape(1)

    alpha = 1.0 / beta_eff            # shape (1,) f32 -> SMEM
    alpha_s = alpha[0]                # scalar for the JAX fallback path

    orig_shape = sdf.shape
    n = sdf.size
    in_item = jnp.dtype(sdf.dtype).itemsize
    out_dtype = jnp.result_type(sdf.dtype, jnp.float32)   # matches torch promotion
    out_item = jnp.dtype(out_dtype).itemsize

    # Largest lane width that divides n -> copy-free 2-D reshape (no pad/slice).
    lanes = next((l for l in _LANE_CHOICES if n % l == 0), None) if n > 0 else None

    if lanes is None or n < max(min_pallas_elems, 1):
        # Ragged (not a multiple of 128), empty, or tiny input: plain JAX.
        # This is 1x HBM traffic and fuses with neighbours; the previous
        # pad + pallas + slice route was ~3x traffic on ragged inputs.
        # TODO(synk): a rank-1 masked-store Pallas variant could also cover
        # ragged n, but XLA already runs this elementwise op at the roofline.
        return alpha_s * jax.nn.sigmoid(-sdf * alpha_s)

    rows = n // lanes
    x2d = sdf.reshape(rows, lanes)    # free reinterpretation (n % lanes == 0)

    # dtype-aware sublane quantum: f32 -> 8, bf16 -> 16, int8/fp8 -> 32.
    sub_q = max(8 * max(1, 4 // in_item), 8 * max(1, 4 // out_item))

    # Byte-budgeted row block (in + out bytes per grid step ~ 8 MiB).
    per_row_bytes = lanes * (in_item + out_item)
    tm = max(sub_q, _round_down(_TARGET_BLOCK_BYTES // per_row_bytes, sub_q))

    if rows <= tm:
        if rows >= 2 * sub_q:
            # Guarantee >= 2 grid steps so v7x's second TensorCore gets work.
            tm = _round_up(pl.cdiv(rows, 2), sub_q)
        else:
            # Single block equal to the full array dims (exempt from (8,128)).
            tm = rows
    grid = (pl.cdiv(rows, tm),)

    out2d = pl.pallas_call(
        _sigmoid_density_kernel,
        out_shape=jax.ShapeDtypeStruct((rows, lanes), out_dtype),
        grid_spec=pl.GridSpec(
            grid=grid,
            in_specs=[
                pl.BlockSpec(memory_space=pltpu.SMEM),           # alpha scalar
                pl.BlockSpec((tm, lanes), lambda i: (i, 0)),     # sdf tile
            ],
            out_specs=pl.BlockSpec((tm, lanes), lambda i: (i, 0)),
        ),
        compiler_params=pltpu.CompilerParams(
            dimension_semantics=("parallel",),     # independent blocks -> megacore
            vmem_limit_bytes=_VMEM_LIMIT_BYTES,
        ),
    )(alpha, x2d)

    return out2d.reshape(orig_shape)


def sigmoid_density_ref(sdf, beta_param, beta_min_param, beta=None):
    """Pure-JAX reference mirroring the PyTorch module (incl. dtype promotion)."""
    if beta is None:
        beta = jnp.abs(beta_param) + beta_min_param
    alpha = 1.0 / jnp.asarray(beta, jnp.float32) if jnp.ndim(beta) == 0 \
        else 1.0 / beta
    return alpha * jax.nn.sigmoid(-sdf * alpha)


if __name__ == "__main__":
    key = jax.random.PRNGKey(0)
    k1, k2, k3, k4, k5 = jax.random.split(key, 5)

    # Deterministic parameter init (matches module __init__ shapes):
    init_val = 0.1
    beta_min = 0.0001
    beta_param = init_val * jnp.ones((1,), jnp.float32)       # learnable beta
    beta_min_param = beta_min * jnp.ones((1,), jnp.float32)   # fixed beta_min

    # 1) Small aligned f32 input, Pallas path forced (single full-array block).
    sdf = jax.random.normal(k1, (2, 4, 16, 16), dtype=jnp.float32) * 0.5
    out = jax.block_until_ready(
        sigmoid_density(sdf, beta_param, beta_min_param, min_pallas_elems=0))
    ref = sigmoid_density_ref(sdf, beta_param, beta_min_param)
    assert out.shape == sdf.shape and out.dtype == jnp.float32
    assert jnp.allclose(out, ref, rtol=1e-5, atol=1e-5), "learned-beta mismatch"

    # 2) Medium aligned f32 input via default threshold: 2-block grid (megacore).
    sdf2 = jax.random.normal(k2, (8, 64, 128), dtype=jnp.float32) * 0.5
    out2 = jax.block_until_ready(sigmoid_density(sdf2, beta_param, beta_min_param))
    ref2 = sigmoid_density_ref(sdf2, beta_param, beta_min_param)
    assert jnp.allclose(out2, ref2, rtol=1e-5, atol=1e-5), "medium-input mismatch"

    # 3) bf16 input, Pallas path; output promotes to f32 like the reference.
    sdf3 = (jax.random.normal(k3, (4, 8, 32, 32), dtype=jnp.float32) * 0.5
            ).astype(jnp.bfloat16)
    out3 = jax.block_until_ready(
        sigmoid_density(sdf3, beta_param, beta_min_param, min_pallas_elems=0))
    ref3 = sigmoid_density_ref(sdf3, beta_param, beta_min_param)
    assert out3.dtype == jnp.float32
    assert jnp.allclose(out3, ref3, rtol=1e-5, atol=1e-5), "bf16-input mismatch"

    # 4) Explicit scalar beta (Pallas path).
    out4 = jax.block_until_ready(
        sigmoid_density(sdf, beta_param, beta_min_param, beta=0.05,
                        min_pallas_elems=0))
    ref4 = sigmoid_density_ref(sdf, beta_param, beta_min_param,
                               beta=jnp.float32(0.05))
    assert jnp.allclose(out4, ref4, rtol=1e-5, atol=1e-5), "explicit-beta mismatch"

    # 5) Ragged element count (3*5*7*11 = 1155): plain-JAX fallback, no pad/slice.
    sdf5 = jax.random.normal(k4, (3, 5, 7, 11), dtype=jnp.float32) * 0.5
    out5 = jax.block_until_ready(sigmoid_density(sdf5, beta_param, beta_min_param))
    ref5 = sigmoid_density_ref(sdf5, beta_param, beta_min_param)
    assert out5.shape == sdf5.shape
    assert jnp.allclose(out5, ref5, rtol=1e-5, atol=1e-5), "ragged-shape mismatch"

    # 6) Per-element explicit beta (broadcast tensor): exact JAX path.
    beta_map = 0.05 + 0.01 * jax.random.uniform(k5, sdf.shape, dtype=jnp.float32)
    out6 = jax.block_until_ready(
        sigmoid_density(sdf, beta_param, beta_min_param, beta=beta_map))
    ref6 = sigmoid_density_ref(sdf, beta_param, beta_min_param, beta=beta_map)
    assert jnp.allclose(out6, ref6, rtol=1e-5, atol=1e-5), "per-element-beta mismatch"

    print("KERNEL_OK")
</pallas_src>

<mosaic_0001>
module attributes {stable_mosaic.version = 11 : i64} {
  func.func @_sigmoid_density_kernel(%arg0: i32, %arg1: memref<1xf32, #tpu.memory_space<smem>>, %arg2: memref<2x1024xf32, #tpu.memory_space<vmem>>, %arg3: memref<2x1024xf32, #tpu.memory_space<vmem>>) attributes {dimension_semantics = [#tpu.dimension_semantics<parallel>], iteration_bounds = array<i64: 1>, scalar_prefetch = 0 : i64, scratch_operands = 0 : i64, tpu.core_type = #tpu.core_type<tc>, window_params = [{transform_indices = @transform_0, window_bounds = array<i64: 1>}, {transform_indices = @transform_1, window_bounds = array<i64: 2, 1024>}, {transform_indices = @transform_2, window_bounds = array<i64: 2, 1024>}]} {
    %c0 = arith.constant 0 : index
    %0 = memref.load %arg1[%c0] : memref<1xf32, #tpu.memory_space<smem>>
    %c0_0 = arith.constant 0 : index
    %c0_1 = arith.constant 0 : index
    %1 = vector.load %arg2[%c0_0, %c0_1] : memref<2x1024xf32, #tpu.memory_space<vmem>>, vector<2x1024xf32>
    %cst = arith.constant 0.000000e+00 : f32
    %2 = vector.broadcast %cst : f32 to vector<2x1024xf32>
    %3 = arith.subf %2, %1 : vector<2x1024xf32>
    %4 = vector.broadcast %0 : f32 to vector<2x1024xf32>
    %5 = arith.mulf %3, %4 : vector<2x1024xf32>
    %6 = arith.negf %5 : vector<2x1024xf32>
    %7 = math.exp %6 : vector<2x1024xf32>
    %cst_2 = arith.constant 1.000000e+00 : f32
    %8 = vector.broadcast %cst_2 : f32 to vector<2x1024xf32>
    %9 = arith.addf %8, %7 : vector<2x1024xf32>
    %10 = arith.divf %8, %9 : vector<2x1024xf32>
    %11 = vector.broadcast %0 : f32 to vector<2x1024xf32>
    %12 = arith.mulf %11, %10 : vector<2x1024xf32>
    %c0_3 = arith.constant 0 : index
    %c0_4 = arith.constant 0 : index
    %13 = vector.load %arg3[%c0_3, %c0_4] : memref<2x1024xf32, #tpu.memory_space<vmem>>, vector<2x1024xf32>
    tpu.vector_store %arg3[%c0_3, %c0_4], %12 {strides = array<i32>} : memref<2x1024xf32, #tpu.memory_space<vmem>>, vector<2x1024xf32>,
    return
  }
  func.func @transform_0(%arg0: i32) -> i32 {
    %c0_i32 = arith.constant 0 : i32
    %c0_i32_0 = arith.constant 0 : i32
    return %c0_i32 : i32
  }
  func.func @transform_1(%arg0: i32) -> (i32, i32) {
    %c0_i32 = arith.constant 0 : i32
    %c0_i32_0 = arith.constant 0 : i32
    return %arg0, %c0_i32 : i32, i32
  }
  func.func @transform_2(%arg0: i32) -> (i32, i32) {
    %c0_i32 = arith.constant 0 : i32
    %c0_i32_0 = arith.constant 0 : i32
    return %arg0, %c0_i32 : i32, i32
  }
}

</mosaic_0001>

<llo_original>
// kernel: tpu_custom_call.1
$region0: #{tpu_custom_call.1}
  #allocation0 [shape = 'u32[]', space=smem, size = 0x4, offset = 0x4, fixed_abs, tag = 'smem constant byte address 0x4 - core index']
  #allocation1 [shape = 'u32[144,128]{1,0:T(1,128)}', space=vmem, size = 0x12000, scoped, tag = 'internal scratch']
  #allocation2 [shape = 'f32[1]{0:T(128)S(6)}', space=smem, size = 0x200, scoped, tag = 'scoped memory for tpu_custom_call.1']
  %s0 = inlined_call_operand.<no memory space> [shape: f32[1], index: 0, kind: input, shape index: {}]
  %s1 = inlined_call_operand.hbm [shape: f32[2,1024], index: 1, kind: input, shape index: {}]
  %s2 = inlined_call_operand.hbm [shape: f32[2,1024], index: 2, kind: output, shape index: {}]
  %s3 = sld [smem:[#allocation0]]
  $region22: #{tpu_custom_call.1} parent=0
    _
  %s5 = ssub.s32 1, %s3
  %s6 = scalar_select 0, %s5, %s3
  %7 = sst [smem:[#allocation2]] %s0
  $region1: #{tpu_custom_call.1} parent=0
    #allocation3 [shape = 'u8[8192]{0}', space=vmem, size = 0x2000, scoped, tag = 'input window, operand 1, single buffered']
    #allocation4 [shape = 's32[1]{0}', space=sflag, size = 0x4, scoped, tag = 'scoped memory for tpu_custom_call.1']
    #allocation5 [shape = 's32[1]{0}', space=sflag, size = 0x4, scoped, tag = 'scoped memory for tpu_custom_call.1']
    #allocation6 [shape = 'u8[8192]{0}', space=vmem, size = 0x2000, scoped, tag = 'output window, operand 0, single buffered']
    %8 = vsyncpa [#allocation4], 0
    %9 = vsyncpa [#allocation5], 0
    // Predicated region
    $region2: #{tpu_custom_call.1} parent=1 // pred_check
      _
    $region3: #{tpu_custom_call.1} parent=1 // pred_check_branch
      %11 = sbr.rel (0) target = $region5
    $region4: #{tpu_custom_call.1} parent=1 // pred_region
      _
    $region5: #{tpu_custom_call.1} parent=1 // pred_fallthru
      _
    // Predicated region
    $region6: #{tpu_custom_call.1} parent=1 // pred_check
      _
    $region7: #{tpu_custom_call.1} parent=1 // pred_check_branch
      %13 = sbr.rel (0) target = $region9
    $region8: #{tpu_custom_call.1} parent=1 // pred_region
      %s15 = ssub.s32 256, 256
      %16 = vsyncadd [#allocation4], %s15
      %s18 = sshll.u32 [#allocation3], 4
      %s19 = int_to_ptr.vmem [resolvable:$true] %s18
      %21 = dma.hbm_to_vmem [thread:$0]  %s1, 256, %s19, [#allocation4]
    $region9: #{tpu_custom_call.1} parent=1 // pred_fallthru
      _
    // Predicated region
    $region10: #{tpu_custom_call.1} parent=1 // pred_check
      _
    $region11: #{tpu_custom_call.1} parent=1 // pred_check_branch
      %23 = sbr.rel (0) target = $region13
    $region12: #{tpu_custom_call.1} parent=1 // pred_region
      %24 = dma.done [#allocation4], 256
    $region13: #{tpu_custom_call.1} parent=1 // pred_fallthru
      _
    %s25 = sld [smem:[#allocation2]]
    %v26 = vld [vmem:[#allocation3] sm:$0xff]
    %v27 = vld [vmem:[#allocation3 + $0x8] sm:$0xff]
    %v28 = vsub.f32 0.0, %v26
    %v29 = vsub.f32 0.0, %v27
    %v30 = vstv %s25
    %v31 = vmul.f32 %v28, %v30
    %v32 = vmul.f32 %v29, %v30
    %v33 = vxor.u32 %v31, 2147483648
    %v34 = vxor.u32 %v32, 2147483648
    %v35 = vmul.f32 %v33, 1.442695
    %v36 = vpow.pop %v35
    %v37 = vmul.f32 %v34, 1.442695
    %v38 = vpow.pop %v37
    %v39 = vadd.f32 %v36, 1.0
    %v40 = vadd.f32 %v38, 1.0
    %v41 = vrcp.pop %v39
    %v42 = vmul.f32 1.0, %v41
    %v43 = vrcp.pop %v40
    %v44 = vmul.f32 1.0, %v43
    %v45 = vmul.f32 %v30, %v42
    %v46 = vmul.f32 %v30, %v44
    %47 = vst [vmem:[#allocation6] sm:$0xff] %v45
    %48 = vst [vmem:[#allocation6 + $0x8] sm:$0xff] %v46
    // Predicated region
    $region14: #{tpu_custom_call.1} parent=1 // pred_check
      _
    $region15: #{tpu_custom_call.1} parent=1 // pred_check_branch
      %50 = sbr.rel (0) target = $region17
    $region16: #{tpu_custom_call.1} parent=1 // pred_region
      %s52 = ssub.s32 256, 256
      %53 = vsyncadd [#allocation5], %s52
      %s55 = sshll.u32 [#allocation6], 4
      %s56 = int_to_ptr.vmem [resolvable:$true] %s55
      %58 = dma.vmem_to_hbm [thread:$0]  %s56, 256, %s2, [#allocation5]
    $region17: #{tpu_custom_call.1} parent=1 // pred_fallthru
      _
    // Predicated region
    $region18: #{tpu_custom_call.1} parent=1 // pred_check
      _
    $region19: #{tpu_custom_call.1} parent=1 // pred_check_branch
      %60 = sbr.rel (0) target = $region21
    $region20: #{tpu_custom_call.1} parent=1 // pred_region
      %61 = dma.done [#allocation5], 256
    $region21: #{tpu_custom_call.1} parent=1 // pred_fallthru
      _
    %62 = vsyncpa [#allocation4], 1
    %63 = vsyncpa [#allocation5], 1

</llo_original>
